<compile_context>
chip_gen: v5e
topology: v5e:2x2
jax: 0.10.0
libtpu: 0.0.40
codegen_flags: <defaults>
</compile_context>

<pallas_src>
import math

import jax
import jax.numpy as jnp
from jax import lax
from jax.experimental import pallas as pl
from jax.experimental.pallas import tpu as pltpu

# ---------------- ShapeContext constants (r1=1.0, r2=4.0, nbins_xy=4, nbins_zy=4)
R1 = 1.0
R2 = 4.0
NBXY = 4
NBZY = 4
NPART = NBXY * NBZY * 2          # 32 partitions == out_channels

VMEM_LIMIT = 32 * 1024 * 1024    # safe on v5e/v6e (128 MiB) and v7x (64 MiB)


def _elu(z):
    return jnp.where(z > 0.0, z, jnp.exp(jnp.minimum(z, 0.0)) - 1.0)


# =====================================================================
# Kernel A: pairwise squared distances, both branches of one batch element
# per grid step, sharing a single (C, N) cloud tile.
#   D[i, j] = ||a_i||^2 + ||b_j||^2 - 2 * a_i . b_j   (MXU)
# =====================================================================
def _pairdist_kernel(a_ref, bt_ref, o_ref):
    gb, s, c = a_ref.shape
    n = bt_ref.shape[-1]
    a = a_ref[...].reshape(gb * s, c)                # fold branches into M
    bt = bt_ref[0]                                   # (C, N) shared cloud
    a2 = jnp.sum(a * a, axis=-1, keepdims=True)      # (gb*s, 1)
    b2 = jnp.sum(bt * bt, axis=0, keepdims=True)     # (1, N)
    # TODO(synk): default MXU precision (bf16 passes); switch this dot to
    # precision=HIGHEST if bit-level parity of the nearest-neighbour ordering
    # with the f32 PyTorch reference is required.
    ab = jnp.dot(a, bt, preferred_element_type=jnp.float32)
    o_ref[...] = (a2 + b2 - 2.0 * ab).reshape(gb, s, n)


def pairwise_sqdist_batched(sampled, clouds):
    """sampled: (G=2B, S, C) interleaved [vehicle, fusion] per batch element;
    clouds: (B, N, C) deduplicated fusion clouds  ->  (G, S, N) squared dists."""
    sampled = sampled.astype(jnp.float32)
    clouds = clouds.astype(jnp.float32)
    G, S, C = sampled.shape
    B, N, _ = clouds.shape
    assert G == 2 * B and S % 8 == 0 and N % 128 == 0
    pad = (-C) % 8
    if pad:  # zero-pad the contraction dim; distances unchanged.
        sampled = jnp.pad(sampled, ((0, 0), (0, 0), (0, pad)))
        clouds = jnp.pad(clouds, ((0, 0), (0, 0), (0, pad)))
        C += pad
    clouds_t = jnp.swapaxes(clouds, 1, 2)            # (B, C, N), B unique clouds
    # TODO(synk): at real cloud sizes, fuse a K-nearest partial selection here
    # (or emit bf16 distances) to avoid the (G, S, N) HBM round-trip to top_k.
    return pl.pallas_call(
        _pairdist_kernel,
        out_shape=jax.ShapeDtypeStruct((G, S, N), jnp.float32),
        grid=(B,),
        in_specs=[
            pl.BlockSpec((2, S, C), lambda b: (b, 0, 0)),   # both branches of b
            pl.BlockSpec((1, C, N), lambda b: (b, 0, 0)),   # cloud DMA'd once/b
        ],
        out_specs=pl.BlockSpec((2, S, N), lambda b: (b, 0, 0)),
        compiler_params=pltpu.CompilerParams(
            dimension_semantics=("parallel",),
            vmem_limit_bytes=VMEM_LIMIT),
    )(sampled, clouds_t)


# =====================================================================
# Kernel B: fused shape-context GT distribution + per-branch MLP + KL.
# One grid step = one batch element = [vehicle branch, fusion branch].
# =====================================================================
def _fused_gt_mlp_kl_kernel(sc_ref, feat_ref,
                            w1s_ref, b1s_ref, w2s_ref, b2s_ref,
                            w3_ref, b3_ref, w4_ref, b4_ref, o_ref):
    _, _, s, k = sc_ref.shape
    m = 2 * s

    # ---------------- shape-context ground-truth distribution ----------------
    sc = sc_ref[...]                                 # (2, 3, S, K) f32
    dist = sc[:, 0].reshape(m, k)
    axy = sc[:, 1].reshape(m, k)
    azy = sc[:, 2].reshape(m, k)

    axy_bins = jnp.floor(axy / (2.0 * math.pi / NBXY))
    azy_bins = jnp.floor(azy / (math.pi / NBZY))
    ang_ok = (axy_bins >= 0.0) & (azy_bins >= 0.0)
    angles_bins = jnp.where(ang_ok, axy_bins * NBZY + azy_bins, -1.0)
    dist_bins = jnp.where(dist >= R2, 1.0,
                          jnp.where(dist >= R1, 0.0, -1.0))
    ok = (dist_bins >= 0.0) & (angles_bins >= 0.0)
    bins = jnp.where(ok, dist_bins * (NBXY * NBZY) + angles_bins, -1.0)

    # 32-bin histogram: VALU compare + XLU lane-reduce per partition, scattered
    # into its output lane with an iota/select (replaces the old one-hot
    # (S, 32*128) matmul that spilled to VMEM and wasted the MXU).
    lane_ids = lax.broadcasted_iota(jnp.int32, (m, NPART), 1)
    counts = jnp.ones((m, NPART), jnp.float32)       # the reference's +1 smoothing
    for p in range(NPART):
        cnt_p = jnp.sum((bins == float(p)).astype(jnp.float32),
                        axis=-1, keepdims=True)      # (m, 1)
        counts = counts + jnp.where(lane_ids == p, cnt_p, 0.0)

    # F.normalize(dim=-1) * 4 -> softmax; keep log-softmax for the KL term.
    norm = jnp.sqrt(jnp.sum(counts * counts, axis=-1, keepdims=True))
    gfeat = counts / jnp.maximum(norm, 1e-12) * 4.0
    gm = jnp.max(gfeat, axis=-1, keepdims=True)
    ge = jnp.exp(gfeat - gm)
    gsum = jnp.sum(ge, axis=-1, keepdims=True)
    gt = ge / gsum
    log_gt = (gfeat - gm) - jnp.log(gsum)

    # ------ projector_low_res / _fusion  ->  projector_final (bf16 MXU) ------
    def dense(h, w, b):
        return jnp.dot(h.astype(jnp.bfloat16), w,
                       preferred_element_type=jnp.float32) + b

    x0 = feat_ref[0]   # block sample 0: vehicle  -> projector_low_res
    x1 = feat_ref[1]   # block sample 1: fusion   -> projector_low_res_fusion
    h0 = _elu(dense(x0, w1s_ref[0], b1s_ref[0]))
    h0 = _elu(dense(h0, w2s_ref[0], b2s_ref[0]))
    h1 = _elu(dense(x1, w1s_ref[1], b1s_ref[1]))
    h1 = _elu(dense(h1, w2s_ref[1], b2s_ref[1]))
    h = jnp.concatenate([h0, h1], axis=0)            # (m, 64), same row order as gt
    h = _elu(dense(h, w3_ref[...], b3_ref[...]))
    h = _elu(dense(h, w4_ref[...], b4_ref[...]))     # (m, 32)

    # log-softmax of the prediction, per-row KL, reduce to one scalar.
    pm = jnp.max(h, axis=-1, keepdims=True)
    log_pred = (h - pm) - jnp.log(
        jnp.sum(jnp.exp(h - pm), axis=-1, keepdims=True))
    row_kl = jnp.sum(gt * (log_gt - log_pred), axis=-1, keepdims=True)   # (m, 1)
    tot = jnp.sum(row_kl, axis=0, keepdims=True)                         # (1, 1)
    o_ref[0] = jnp.broadcast_to(tot, (1, 128))       # lane-dense scalar write


def fused_gt_mlp_kl(sc, feat, params):
    """sc: (G, 3, S, K) packed [dist, angle_xy, angle_zy]; feat: (G, S, 64);
    G = 2*B interleaved [vehicle, fusion] per batch element.
    Returns (B,) per-batch-element KL sums (both branches combined)."""
    G, _, S, K = sc.shape
    B = G // 2
    F = feat.shape[-1]
    w1s = jnp.stack([params["low"][0],
                     params["low_fusion"][0]]).astype(jnp.bfloat16)
    b1s = jnp.stack([params["low"][1], params["low_fusion"][1]])
    w2s = jnp.stack([params["low"][2],
                     params["low_fusion"][2]]).astype(jnp.bfloat16)
    b2s = jnp.stack([params["low"][3], params["low_fusion"][3]])
    w3, b3, w4, b4 = params["final"]
    w3 = w3.astype(jnp.bfloat16)
    w4 = w4.astype(jnp.bfloat16)

    def const(arr):  # full, constant-index block -> stays VMEM-resident
        nd = arr.ndim

        def imap(b):
            return (0,) * nd

        return pl.BlockSpec(arr.shape, imap)

    out = pl.pallas_call(
        _fused_gt_mlp_kl_kernel,
        out_shape=jax.ShapeDtypeStruct((B, 1, 128), jnp.float32),
        grid=(B,),
        in_specs=[
            pl.BlockSpec((2, 3, S, K), lambda b: (b, 0, 0, 0)),
            pl.BlockSpec((2, S, F), lambda b: (b, 0, 0)),
            const(w1s), const(b1s), const(w2s), const(b2s),
            const(w3), const(b3), const(w4), const(b4),
        ],
        out_specs=pl.BlockSpec((1, 1, 128), lambda b: (b, 0, 0)),
        compiler_params=pltpu.CompilerParams(
            dimension_semantics=("parallel",),
            vmem_limit_bytes=VMEM_LIMIT),
    )(sc.astype(jnp.float32), feat.astype(jnp.bfloat16),
      w1s, b1s, w2s, b2s, w3, b3, w4, b4)
    return out[:, 0, 0]


# =====================================================================
# Plain-JAX glue reproducing the module forward.
# =====================================================================
def limit_coor_range_jax(coor, spatial_shape):
    # Faithful to the reference (all three clamps write COLUMN 0).
    D, H, W, _ = spatial_shape
    c0 = coor[:, 0]
    c0 = jnp.where(coor[:, 0] >= D, D - 1, c0)
    c0 = jnp.where(coor[:, 1] >= H, H - 1, c0)
    c0 = jnp.where(coor[:, 2] >= W, W - 1, c0)
    return jnp.stack([c0, coor[:, 1], coor[:, 2]], axis=1)


def init_linear(key, fan_in, fan_out):
    k1, k2 = jax.random.split(key)
    bound = 1.0 / math.sqrt(fan_in)
    w = jax.random.uniform(k1, (fan_in, fan_out), jnp.float32, -bound, bound)
    b = jax.random.uniform(k2, (1, fan_out), jnp.float32, -bound, bound)
    return w, b


def init_params(key, in_channels=16, out_channels=32):
    h = in_channels * 4  # 64
    ks = jax.random.split(key, 6)
    low = init_linear(ks[0], h, h) + init_linear(ks[1], h, h)
    low_fusion = init_linear(ks[2], h, h) + init_linear(ks[3], h, h)
    final = init_linear(ks[4], h, h) + init_linear(ks[5], h, out_channels)
    return {"low": low, "low_fusion": low_fusion, "final": final}


def cooperative_loss_forward(params, inputs, sample_keys,
                             sample_num=128, topk_nearest=64):
    vehicle_points = inputs["vehicle_points"]
    fusion_points = inputs["fusion_points"]
    veh_sfs = inputs["vehicle_spatial_features"]
    veh_sf_coors = inputs["vehicle_spatial_feature_voxels_coors"]
    fus_sfs = inputs["fusion_spatial_features"]
    fus_sf_coors = inputs["fusion_spatial_feature_voxels_coors"]

    batch_size = len(vehicle_points)
    assert sample_num % 8 == 0

    sampled_list, cloud_list, feat_list = [], [], []
    for b in range(batch_size):
        veh_pts = vehicle_points[b].astype(jnp.float32)
        fus_pts = fusion_points[b].astype(jnp.float32)
        veh_coor = limit_coor_range_jax(
            veh_sf_coors[b].astype(jnp.int32) // 8, veh_sfs[b].shape)
        fus_coor = fus_sf_coors[b].astype(jnp.int32) // 8

        # branch 0: sampled vehicle points vs fusion cloud (projector_low_res)
        idx_v = jax.random.permutation(sample_keys[b][0],
                                       veh_pts.shape[0])[:sample_num]
        cv = veh_coor[idx_v]
        sampled_list.append(veh_pts[idx_v])
        feat_list.append(veh_sfs[b][cv[:, 0], cv[:, 1], cv[:, 2], :])

        # branch 1: sampled fusion points vs fusion cloud (projector_low_res_fusion)
        idx_f = jax.random.permutation(sample_keys[b][1],
                                       fus_pts.shape[0])[:sample_num]
        cf = fus_coor[idx_f]
        sampled_list.append(fus_pts[idx_f])
        feat_list.append(fus_sfs[b][cf[:, 0], cf[:, 1], cf[:, 2], :])

        # deduplicated: ONE fusion cloud per batch element, shared by both branches
        cloud_list.append(fus_pts)

    # TODO(synk): assumes equal point counts across batch elements (pad otherwise).
    sampled_all = jnp.stack(sampled_list)             # (G, S, C) interleaved
    feat_all = jnp.stack(feat_list)                   # (G, S, 64)
    cloud_all = jnp.stack(cloud_list)                 # (B, N, C) unique clouds
    G = 2 * batch_size

    # ---- Kernel A: pairwise squared distances over ALL point channels -------
    d = pairwise_sqdist_batched(sampled_all, cloud_all)        # (G, S, N)
    # TODO(synk): MXU formulation + lax.top_k may reorder ties relative to the
    # reference subtract-square + torch.sort.
    _, idx = lax.top_k(-d, topk_nearest)                       # (G, S, K) nearest-first

    # Gather xyz of the K nearest fusion points; relative to the nearest one.
    fus_xyz = cloud_all[:, :, :3]                              # (B, N, 3)
    idx_b = idx.reshape(batch_size, 2, sample_num, topk_nearest)
    queried = jax.vmap(lambda pts, ind: pts[ind])(fus_xyz, idx_b)
    queried = queried.reshape(G, sample_num, topk_nearest, 3)  # (G, S, K, 3)
    rel = queried - queried[:, :, :1, :]
    dist = jnp.sqrt(jnp.sum(rel * rel, axis=-1) + 1e-7)
    # TODO(synk): atan2 kept in plain JAX (no guaranteed Mosaic lowering).
    axy = jnp.fmod(jnp.arctan2(rel[..., 1], rel[..., 0]) + 2.0 * math.pi,
                   2.0 * math.pi)
    azy = jnp.fmod(jnp.arctan2(rel[..., 1], rel[..., 2]) + 2.0 * math.pi,
                   math.pi)
    sc = jnp.stack([dist, axy, azy], axis=1)                   # (G, 3, S, K)

    # ---- Kernel B: fused gt-distribution + MLP + KL (scalar per batch elem) --
    per_step_kl = fused_gt_mlp_kl(sc, feat_all, params)        # (B,)

    # 10 * KLDiv(batchmean) summed over all batch x branch terms.
    loss = 10.0 * jnp.sum(per_step_kl) / sample_num
    return loss.reshape(1)


# =====================================================================
if __name__ == "__main__":
    key = jax.random.PRNGKey(0)
    B = 2
    N_V, N_F, C_PT = 256, 256, 4
    D, H, W, C_FEAT = 2, 16, 16, 64
    SAMPLE_NUM, TOPK = 128, 64

    keys = jax.random.split(key, 16)
    params = init_params(keys[0])

    inputs = {
        "vehicle_points": [],
        "fusion_points": [],
        "vehicle_voxels_coors": [],  # present in the reference API, unused
        "vehicle_spatial_features": [],
        "vehicle_spatial_feature_voxels_coors": [],
        "fusion_spatial_features": [],
        "fusion_spatial_feature_voxels_coors": [],
    }
    sample_keys = []
    for b in range(B):
        kb = jax.random.split(keys[1 + b], 10)
        inputs["vehicle_points"].append(
            jax.random.normal(kb[0], (N_V, C_PT), jnp.float32) * 5.0)
        inputs["fusion_points"].append(
            jax.random.normal(kb[1], (N_F, C_PT), jnp.float32) * 5.0)
        inputs["vehicle_voxels_coors"].append(
            jax.random.randint(kb[2], (N_V, 3), 0, 8, jnp.int32))
        inputs["vehicle_spatial_features"].append(
            jax.random.normal(kb[3], (D, H, W, C_FEAT), jnp.float32))
        inputs["vehicle_spatial_feature_voxels_coors"].append(
            jnp.stack([jax.random.randint(kb[4], (N_V,), 0, D * 8, jnp.int32),
                       jax.random.randint(kb[5], (N_V,), 0, H * 8, jnp.int32),
                       jax.random.randint(kb[6], (N_V,), 0, W * 8, jnp.int32)],
                      axis=1))
        inputs["fusion_spatial_features"].append(
            jax.random.normal(kb[7], (D, H, W, C_FEAT), jnp.float32))
        inputs["fusion_spatial_feature_voxels_coors"].append(
            jnp.stack([jax.random.randint(kb[8], (N_F,), 0, D * 8, jnp.int32),
                       jax.random.randint(kb[9], (N_F,), 0, H * 8, jnp.int32),
                       jax.random.randint(kb[4], (N_F,), 0, W * 8, jnp.int32)],
                      axis=1))
        sample_keys.append(jax.random.split(keys[8 + b], 2))

    loss = cooperative_loss_forward(params, inputs, sample_keys,
                                    sample_num=SAMPLE_NUM,
                                    topk_nearest=TOPK)
    loss = jax.block_until_ready(loss)
    assert loss.shape == (1,) and bool(jnp.isfinite(loss).all())
    print("KERNEL_OK")
</pallas_src>

<mosaic_0001>
module attributes {stable_mosaic.version = 11 : i64} {
  func.func @_pairdist_kernel(%arg0: i32, %arg1: memref<2x128x8xf32, #tpu.memory_space<vmem>>, %arg2: memref<1x8x256xf32, #tpu.memory_space<vmem>>, %arg3: memref<2x128x256xf32, #tpu.memory_space<vmem>>) attributes {dimension_semantics = [#tpu.dimension_semantics<parallel>], iteration_bounds = array<i64: 2>, scalar_prefetch = 0 : i64, scratch_operands = 0 : i64, tpu.core_type = #tpu.core_type<tc>, window_params = [{transform_indices = @transform_0, window_bounds = array<i64: 2, 128, 8>}, {transform_indices = @transform_1, window_bounds = array<i64: 1, 8, 256>}, {transform_indices = @transform_2, window_bounds = array<i64: 2, 128, 256>}]} {
    %c0 = arith.constant 0 : index
    %c0_0 = arith.constant 0 : index
    %c0_1 = arith.constant 0 : index
    %0 = vector.load %arg1[%c0, %c0_0, %c0_1] : memref<2x128x8xf32, #tpu.memory_space<vmem>>, vector<2x128x8xf32>
    %1 = vector.shape_cast %0 : vector<2x128x8xf32> to vector<256x8xf32>
    %c0_2 = arith.constant 0 : index
    %c0_3 = arith.constant 0 : index
    %c0_4 = arith.constant 0 : index
    %2 = vector.load %arg2[%c0_2, %c0_3, %c0_4] : memref<1x8x256xf32, #tpu.memory_space<vmem>>, vector<1x8x256xf32>
    %3 = vector.shape_cast %2 : vector<1x8x256xf32> to vector<8x256xf32>
    %4 = arith.mulf %1, %1 : vector<256x8xf32>
    %cst = arith.constant dense<0.000000e+00> : vector<256xf32>
    %5 = vector.multi_reduction <add>, %4, %cst [1] : vector<256x8xf32> to vector<256xf32>
    %6 = vector.shape_cast %5 : vector<256xf32> to vector<256x1xf32>
    %7 = arith.mulf %3, %3 : vector<8x256xf32>
    %cst_5 = arith.constant dense<0.000000e+00> : vector<256xf32>
    %8 = vector.multi_reduction <add>, %7, %cst_5 [0] : vector<8x256xf32> to vector<256xf32>
    %9 = vector.shape_cast %8 : vector<256xf32> to vector<1x256xf32>
    %cst_6 = arith.constant dense<0.000000e+00> : vector<256x256xf32>
    %10 = tpu.matmul %1, %3, %cst_6 {dimension_numbers = #tpu.dot_dimension_numbers<[1], [0], [0], [1], [0, 0, 1, 1], [], []>} : vector<256x8xf32>, vector<8x256xf32>, vector<256x256xf32> -> vector<256x256xf32>
    %11 = vector.broadcast %6 : vector<256x1xf32> to vector<256x256xf32>
    %12 = vector.broadcast %9 : vector<1x256xf32> to vector<256x256xf32>
    %13 = arith.addf %11, %12 : vector<256x256xf32>
    %cst_7 = arith.constant 2.000000e+00 : f32
    %14 = vector.broadcast %cst_7 : f32 to vector<256x256xf32>
    %15 = arith.mulf %14, %10 : vector<256x256xf32>
    %16 = arith.subf %13, %15 : vector<256x256xf32>
    %17 = vector.shape_cast %16 : vector<256x256xf32> to vector<2x128x256xf32>
    %c0_8 = arith.constant 0 : index
    %c0_9 = arith.constant 0 : index
    %c0_10 = arith.constant 0 : index
    %18 = vector.load %arg3[%c0_8, %c0_9, %c0_10] : memref<2x128x256xf32, #tpu.memory_space<vmem>>, vector<2x128x256xf32>
    tpu.vector_store %arg3[%c0_8, %c0_9, %c0_10], %17 {strides = array<i32>} : memref<2x128x256xf32, #tpu.memory_space<vmem>>, vector<2x128x256xf32>,
    return
  }
  func.func @transform_0(%arg0: i32) -> (i32, i32, i32) {
    %c0_i32 = arith.constant 0 : i32
    %c0_i32_0 = arith.constant 0 : i32
    %c0_i32_1 = arith.constant 0 : i32
    return %arg0, %c0_i32, %c0_i32_0 : i32, i32, i32
  }
  func.func @transform_1(%arg0: i32) -> (i32, i32, i32) {
    %c0_i32 = arith.constant 0 : i32
    %c0_i32_0 = arith.constant 0 : i32
    %c0_i32_1 = arith.constant 0 : i32
    return %arg0, %c0_i32, %c0_i32_0 : i32, i32, i32
  }
  func.func @transform_2(%arg0: i32) -> (i32, i32, i32) {
    %c0_i32 = arith.constant 0 : i32
    %c0_i32_0 = arith.constant 0 : i32
    %c0_i32_1 = arith.constant 0 : i32
    return %arg0, %c0_i32, %c0_i32_0 : i32, i32, i32
  }
}

</mosaic_0001>

<llo_original>
// kernel: tpu_custom_call.1
$region0: #{tpu_custom_call.1}
  #allocation0 [shape = 'u32[]', space=smem, size = 0x4, offset = 0x4, fixed_abs, tag = 'smem constant byte address 0x4 - core index']
  #allocation1 [shape = 'u32[72,128]{1,0:T(1,128)}', space=vmem, size = 0x9000, scoped, tag = 'internal scratch']
  %s0 = inlined_call_operand.vmem [shape: f32[4,128,8], index: 0, kind: input, shape index: {}]
  %s1 = inlined_call_operand.vmem [shape: f32[2,8,256], index: 1, kind: input, shape index: {}]
  %s2 = inlined_call_operand.hbm [shape: f32[4,128,256], index: 2, kind: output, shape index: {}]
  %s3 = sld [smem:[#allocation0]]
  $region41: #{tpu_custom_call.1} parent=0
    _
  %s5 = ssub.s32 1, %s3
  %s6 = scalar_select 0, %s5, %s3
  $region1: #{tpu_custom_call.1} parent=0
    #allocation2 [shape = 'u8[524288]{0}', space=vmem, size = 0x80000, scoped, tag = 'output window, operand 0']
    #allocation3 [shape = 's32[2]{0}', space=sflag, size = 0x8, scoped, tag = 'scoped memory for tpu_custom_call.1']
    %7 = vsyncpa [#allocation3], 0
    %s8 = scalar_lea.sflag [#allocation3], 1
    %9 = vsyncpa %s8, 0
    loop: start=0, step=1, limit=4
    $region2: #{tpu_custom_call.1} parent=1 // loop_pre_header
      _
    $region3: #{tpu_custom_call.1} parent=1 // loop_header
      %s11 = sphi 0, %s15
      %p12 = scmp.ge.s32.totalorder %s11, 4
      %s21 = sphi 0, %s23
      %s24 = sphi 0, %s21
      %s25 = sphi 0, %s24
      %s41 = sphi 0, %s25
      %s47 = sphi 0, %s49
      %s50 = sphi 0, %s47
      %s51 = sphi 0, %s50
      %s67 = sphi 0, %s51
      %s73 = sphi 0, %s75
      %s76 = sphi 0, %s73
      %s77 = sphi 0, %s76
      %s93 = sphi 0, %s77
    $region4: #{tpu_custom_call.1} parent=1 // loop_header_branch
      %14 = sbr.rel (%p12) target = $region8
    $region5: #{tpu_custom_call.1} parent=1 // loop_body
      %s16 = ssub.s32 %s11, 1
      %s17 = ssub.s32 %s11, 2
      %s18 = sadd.s32 %s11, 1
      %s19 = ssub.s32 %s11, %s18
      %p20 = scmp.eq.s32.totalorder %s19, 0
      %s22 = sadd.s32 %s21, 1
      %s23 = scalar_select %p20, %s21, %s22
      %p26 = pneg %p20
      %p27 = scmp.eq.s32.totalorder %s11, 1
      %p28 = por %p26, %p27
      %p29 = scmp.ne.s32.totalorder %s21, %s24
      %p30 = scmp.eq.s32.totalorder %s11, 0
      %p31 = por %p29, %p30
      %p32 = scmp.ne.s32.totalorder %s21, %s24
      %p33 = scmp.eq.s32.totalorder %s16, 1
      %p34 = por %p32, %p33
      %p35 = scmp.ne.s32.totalorder %s24, %s25
      %p36 = scmp.eq.s32.totalorder %s16, 0
      %p37 = por %p35, %p36
      %p38 = scmp.ne.s32.totalorder %s24, %s25
      %p39 = scmp.eq.s32.totalorder %s17, 1
      %p40 = por %p38, %p39
      %p42 = scmp.ne.s32.totalorder %s25, %s41
      %p43 = scmp.eq.s32.totalorder %s17, 0
      %p44 = por %p42, %p43
      %s45 = ssub.s32 %s11, %s18
      %p46 = scmp.eq.s32.totalorder %s45, 0
      %s48 = sadd.s32 %s47, 1
      %s49 = scalar_select %p46, %s47, %s48
      %p52 = pneg %p46
      %p53 = scmp.eq.s32.totalorder %s11, 1
      %p54 = por %p52, %p53
      %p55 = scmp.ne.s32.totalorder %s47, %s50
      %p56 = scmp.eq.s32.totalorder %s11, 0
      %p57 = por %p55, %p56
      %p58 = scmp.ne.s32.totalorder %s47, %s50
      %p59 = scmp.eq.s32.totalorder %s16, 1
      %p60 = por %p58, %p59
      %p61 = scmp.ne.s32.totalorder %s50, %s51
      %p62 = scmp.eq.s32.totalorder %s16, 0
      %p63 = por %p61, %p62
      %p64 = scmp.ne.s32.totalorder %s50, %s51
      %p65 = scmp.eq.s32.totalorder %s17, 1
      %p66 = por %p64, %p65
      %p68 = scmp.ne.s32.totalorder %s51, %s67
      %p69 = scmp.eq.s32.totalorder %s17, 0
      %p70 = por %p68, %p69
      %s71 = ssub.s32 %s11, %s18
      %p72 = scmp.eq.s32.totalorder %s71, 0
      %s74 = sadd.s32 %s73, 1
      %s75 = scalar_select %p72, %s73, %s74
      %p78 = pneg %p72
      %p79 = scmp.eq.s32.totalorder %s11, 1
      %p80 = por %p78, %p79
      %p81 = scmp.ne.s32.totalorder %s73, %s76
      %p82 = scmp.eq.s32.totalorder %s11, 0
      %p83 = por %p81, %p82
      %p84 = scmp.ne.s32.totalorder %s73, %s76
      %p85 = scmp.eq.s32.totalorder %s16, 1
      %p86 = por %p84, %p85
      %p87 = scmp.ne.s32.totalorder %s76, %s77
      %p88 = scmp.eq.s32.totalorder %s16, 0
      %p89 = por %p87, %p88
      %p90 = scmp.ne.s32.totalorder %s76, %s77
      %p91 = scmp.eq.s32.totalorder %s17, 1
      %p92 = por %p90, %p91
      %p94 = scmp.ne.s32.totalorder %s77, %s93
      %p95 = scmp.eq.s32.totalorder %s17, 0
      %p96 = por %p94, %p95
      %p97 = scmp.le.s32.totalorder 1, %s11
      %p98 = scmp.lt.s32.totalorder %s11, 3
      %p99 = pnand %p97, %p98
      %p100 = pneg %p99
      // Predicated region
      $region9: #{tpu_custom_call.1} parent=5 // pred_check
        _
      $region10: #{tpu_custom_call.1} parent=5 // pred_check_branch
        %102 = sbr.rel (%p99) target = $region12
      $region11: #{tpu_custom_call.1} parent=5 // pred_region
        %s103 = ssub.s32 %s11, 1
      $region12: #{tpu_custom_call.1} parent=5 // pred_fallthru
        _
      %p104 = scmp.lt.s32.totalorder %s11, 2
      // Predicated region
      $region13: #{tpu_custom_call.1} parent=5 // pred_check
        %p105 = pneg %p104
      $region14: #{tpu_custom_call.1} parent=5 // pred_check_branch
        %107 = sbr.rel (%p105) target = $region16
      $region15: #{tpu_custom_call.1} parent=5 // pred_region
        // Predicated region
        $region17: #{tpu_custom_call.1} parent=15 // pred_check
          %p108 = pneg %p31
        $region18: #{tpu_custom_call.1} parent=15 // pred_check_branch
          %110 = sbr.rel (%p108) target = $region20
        $region19: #{tpu_custom_call.1} parent=15 // pred_region
          %s111 = smul.u32 2, %s11
          %p112 = scmp.lt.s32.totalorder %s111, 3
          %s113 = scalar_select %p112, %s111, 3
          %s114 = smul.addr %s113, 16
          %s115 = smul.addr %s114, 8
          %s116 = scalar_lea.vmem %s0, %s115
          %s117 = smul.u32 2, %s11
        $region20: #{tpu_custom_call.1} parent=15 // pred_fallthru
          _
        // Predicated region
        $region21: #{tpu_custom_call.1} parent=15 // pred_check
          %p118 = pneg %p57
        $region22: #{tpu_custom_call.1} parent=15 // pred_check_branch
          %120 = sbr.rel (%p118) target = $region24
        $region23: #{tpu_custom_call.1} parent=15 // pred_region
          %p121 = scmp.lt.s32.totalorder %s11, 1
          %s122 = scalar_select %p121, %s11, 1
          %s123 = smul.addr %s122, 2
          %s124 = smul.addr %s123, 8
          %s125 = scalar_lea.vmem %s1, %s124
        $region24: #{tpu_custom_call.1} parent=15 // pred_fallthru
          _
      $region16: #{tpu_custom_call.1} parent=5 // pred_fallthru
        _
      %p126 = scmp.le.s32.totalorder 1, %s11
      %p127 = scmp.lt.s32.totalorder %s11, 3
      %p128 = pnand %p126, %p127
      %p129 = pneg %p128
      // Predicated region
      $region25: #{tpu_custom_call.1} parent=5 // pred_check
        _
      $region26: #{tpu_custom_call.1} parent=5 // pred_check_branch
        %131 = sbr.rel (%p128) target = $region28
      $region27: #{tpu_custom_call.1} parent=5 // pred_region
        %s132 = ssub.s32 %s11, 1
        %s133 = smul.u32 2, %s16
        %p134 = scmp.lt.s32.totalorder %s133, 3
        %s135 = scalar_select %p134, %s133, 3
        %s136 = smul.addr %s135, 16
        %s137 = smul.addr %s136, 8
        %s138 = scalar_lea.vmem %s0, %s137
        %p139 = pneg %p37
        %p140 = pneg %p34
        %p141 = scmp.lt.s32.totalorder %s16, 1
        %s142 = scalar_select %p141, %s16, 1
        %s143 = smul.addr %s142, 2
        %s144 = smul.addr %s143, 8
        %s145 = scalar_lea.vmem %s1, %s144
        %p146 = pneg %p63
        %p147 = pneg %p60
        %p148 = pneg %p89
        %p149 = pneg %p86
        %s150 = sand.u32 %s76, 1
        %s151 = scalar_lea.sflag [#allocation3], %s150
        %s152 = sand.u32 %s76, 1
        %s153 = smul.addr %s152, 512
        %s154 = scalar_lea.vmem [#allocation2], %s153
        %s155 = smul.u32 2, %s16
        %p156 = scmp.lt.s32.totalorder %s155, 3
        %s157 = scalar_select %p156, %s155, 3
        %s158 = smul.addr %s157, 16
        %s159 = smul.addr %s158, 8
        %s160 = scalar_lea.vmem %s0, %s159
        %s161 = smul.u32 2, %s16
        %p162 = scmp.lt.s32.totalorder %s16, 1
        %s163 = scalar_select %p162, %s16, 1
        %s164 = smul.addr %s163, 2
        %s165 = smul.addr %s164, 8
        %s166 = scalar_lea.vmem %s1, %s165
        %s167 = smul.u32 2, %s16
        %v168 = vld [vmem:[%s160] sm:$0xff]
        %v169 = vld [vmem:[%s160 + $0x8] sm:$0xff]
        %v170 = vld [vmem:[%s160 + $0x10] sm:$0xff]
        %v171 = vld [vmem:[%s160 + $0x18] sm:$0xff]
        %v172 = vld [vmem:[%s160 + $0x20] sm:$0xff]
        %v173 = vld [vmem:[%s160 + $0x28] sm:$0xff]
        %v174 = vld [vmem:[%s160 + $0x30] sm:$0xff]
        %v175 = vld [vmem:[%s160 + $0x38] sm:$0xff]
        %v176 = vld [vmem:[%s160 + $0x40] sm:$0xff]
        %v177 = vld [vmem:[%s160 + $0x48] sm:$0xff]
        %v178 = vld [vmem:[%s160 + $0x50] sm:$0xff]
        %v179 = vld [vmem:[%s160 + $0x58] sm:$0xff]
        %v180 = vld [vmem:[%s160 + $0x60] sm:$0xff]
        %v181 = vld [vmem:[%s160 + $0x68] sm:$0xff]
        %v182 = vld [vmem:[%s160 + $0x70] sm:$0xff]
        %v183 = vld [vmem:[%s160 + $0x78] sm:$0xff]
        %v184 = vld [vmem:[%s160 + $0x80] sm:$0xff]
        %v185 = vld [vmem:[%s160 + $0x88] sm:$0xff]
        %v186 = vld [vmem:[%s160 + $0x90] sm:$0xff]
        %v187 = vld [vmem:[%s160 + $0x98] sm:$0xff]
        %v188 = vld [vmem:[%s160 + $0xa0] sm:$0xff]
        %v189 = vld [vmem:[%s160 + $0xa8] sm:$0xff]
        %v190 = vld [vmem:[%s160 + $0xb0] sm:$0xff]
        %v191 = vld [vmem:[%s160 + $0xb8] sm:$0xff]
        %v192 = vld [vmem:[%s160 + $0xc0] sm:$0xff]
        %v193 = vld [vmem:[%s160 + $0xc8] sm:$0xff]
        %v194 = vld [vmem:[%s160 + $0xd0] sm:$0xff]
        %v195 = vld [vmem:[%s160 + $0xd8] sm:$0xff]
        %v196 = vld [vmem:[%s160 + $0xe0] sm:$0xff]
        %v197 = vld [vmem:[%s160 + $0xe8] sm:$0xff]
        %v198 = vld [vmem:[%s160 + $0xf0] sm:$0xff]
        %v199 = vld [vmem:[%s160 + $0xf8] sm:$0xff]
        %v200 = vld [vmem:[%s166] sm:$0xff]
        %v201 = vld [vmem:[%s166 + $0x8] sm:$0xff]
        %v202 = vmul.f32 %v168, %v168
        %v203 = vmul.f32 %v169, %v169
        %v204 = vmul.f32 %v170, %v170
        %v205 = vmul.f32 %v171, %v171
        %v206 = vmul.f32 %v172, %v172
        %v207 = vmul.f32 %v173, %v173
        %v208 = vmul.f32 %v174, %v174
        %v209 = vmul.f32 %v175, %v175
        %v210 = vmul.f32 %v176, %v176
        %v211 = vmul.f32 %v177, %v177
        %v212 = vmul.f32 %v178, %v178
        %v213 = vmul.f32 %v179, %v179
        %v214 = vmul.f32 %v180, %v180
        %v215 = vmul.f32 %v181, %v181
        %v216 = vmul.f32 %v182, %v182
        %v217 = vmul.f32 %v183, %v183
        %v218 = vmul.f32 %v184, %v184
        %v219 = vmul.f32 %v185, %v185
        %v220 = vmul.f32 %v186, %v186
        %v221 = vmul.f32 %v187, %v187
        %v222 = vmul.f32 %v188, %v188
        %v223 = vmul.f32 %v189, %v189
        %v224 = vmul.f32 %v190, %v190
        %v225 = vmul.f32 %v191, %v191
        %v226 = vmul.f32 %v192, %v192
        %v227 = vmul.f32 %v193, %v193
        %v228 = vmul.f32 %v194, %v194
        %v229 = vmul.f32 %v195, %v195
        %v230 = vmul.f32 %v196, %v196
        %v231 = vmul.f32 %v197, %v197
        %v232 = vmul.f32 %v198, %v198
        %v233 = vmul.f32 %v199, %v199
        %vm234 = vcmask 64512
        %v235 = vsel %vm234, %v202, 0.0
        %236 = vadd.xlane.f32.xlu0 %v235
        %v237 = vpop.xlane.xlu0 %236
        %v238 = vsel %vm234, %v203, 0.0
        %239 = vadd.xlane.f32.xlu0 %v238
        %v240 = vpop.xlane.xlu0 %239
        %v241 = vsel %vm234, %v204, 0.0
        %242 = vadd.xlane.f32.xlu0 %v241
        %v243 = vpop.xlane.xlu0 %242
        %v244 = vsel %vm234, %v205, 0.0
        %245 = vadd.xlane.f32.xlu0 %v244
        %v246 = vpop.xlane.xlu0 %245
        %v247 = vsel %vm234, %v206, 0.0
        %248 = vadd.xlane.f32.xlu0 %v247
        %v249 = vpop.xlane.xlu0 %248
        %v250 = vsel %vm234, %v207, 0.0
        %251 = vadd.xlane.f32.xlu0 %v250
        %v252 = vpop.xlane.xlu0 %251
        %v253 = vsel %vm234, %v208, 0.0
        %254 = vadd.xlane.f32.xlu0 %v253
        %v255 = vpop.xlane.xlu0 %254
        %v256 = vsel %vm234, %v209, 0.0
        %257 = vadd.xlane.f32.xlu0 %v256
        %v258 = vpop.xlane.xlu0 %257
        %v259 = vsel %vm234, %v210, 0.0
        %260 = vadd.xlane.f32.xlu0 %v259
        %v261 = vpop.xlane.xlu0 %260
        %v262 = vsel %vm234, %v211, 0.0
        %263 = vadd.xlane.f32.xlu0 %v262
        %v264 = vpop.xlane.xlu0 %263
        %v265 = vsel %vm234, %v212, 0.0
        %266 = vadd.xlane.f32.xlu0 %v265
        %v267 = vpop.xlane.xlu0 %266
        %v268 = vsel %vm234, %v213, 0.0
        %269 = vadd.xlane.f32.xlu0 %v268
        %v270 = vpop.xlane.xlu0 %269
        %v271 = vsel %vm234, %v214, 0.0
        %272 = vadd.xlane.f32.xlu0 %v271
        %v273 = vpop.xlane.xlu0 %272
        %v274 = vsel %vm234, %v215, 0.0
        %275 = vadd.xlane.f32.xlu0 %v274
        %v276 = vpop.xlane.xlu0 %275
        %v277 = vsel %vm234, %v216, 0.0
        %278 = vadd.xlane.f32.xlu0 %v277
        %v279 = vpop.xlane.xlu0 %278
        %v280 = vsel %vm234, %v217, 0.0
        %281 = vadd.xlane.f32.xlu0 %v280
        %v282 = vpop.xlane.xlu0 %281
        %v283 = vsel %vm234, %v218, 0.0
        %284 = vadd.xlane.f32.xlu0 %v283
        %v285 = vpop.xlane.xlu0 %284
        %v286 = vsel %vm234, %v219, 0.0
        %287 = vadd.xlane.f32.xlu0 %v286
        %v288 = vpop.xlane.xlu0 %287
        %v289 = vsel %vm234, %v220, 0.0
        %290 = vadd.xlane.f32.xlu0 %v289
        %v291 = vpop.xlane.xlu0 %290
        %v292 = vsel %vm234, %v221, 0.0
        %293 = vadd.xlane.f32.xlu0 %v292
        %v294 = vpop.xlane.xlu0 %293
        %v295 = vsel %vm234, %v222, 0.0
        %296 = vadd.xlane.f32.xlu0 %v295
        %v297 = vpop.xlane.xlu0 %296
        %v298 = vsel %vm234, %v223, 0.0
        %299 = vadd.xlane.f32.xlu0 %v298
        %v300 = vpop.xlane.xlu0 %299
        %v301 = vsel %vm234, %v224, 0.0
        %302 = vadd.xlane.f32.xlu0 %v301
        %v303 = vpop.xlane.xlu0 %302
        %v304 = vsel %vm234, %v225, 0.0
        %305 = vadd.xlane.f32.xlu0 %v304
        %v306 = vpop.xlane.xlu0 %305
        %v307 = vsel %vm234, %v226, 0.0
        %308 = vadd.xlane.f32.xlu0 %v307
        %v309 = vpop.xlane.xlu0 %308
        %v310 = vsel %vm234, %v227, 0.0
        %311 = vadd.xlane.f32.xlu0 %v310
        %v312 = vpop.xlane.xlu0 %311
        %v313 = vsel %vm234, %v228, 0.0
        %314 = vadd.xlane.f32.xlu0 %v313
        %v315 = vpop.xlane.xlu0 %314
        %v316 = vsel %vm234, %v229, 0.0
        %317 = vadd.xlane.f32.xlu0 %v316
        %v318 = vpop.xlane.xlu0 %317
        %v319 = vsel %vm234, %v230, 0.0
        %320 = vadd.xlane.f32.xlu0 %v319
        %v321 = vpop.xlane.xlu0 %320
        %v322 = vsel %vm234, %v231, 0.0
        %323 = vadd.xlane.f32.xlu0 %v322
        %v324 = vpop.xlane.xlu0 %323
        %v325 = vsel %vm234, %v232, 0.0
        %326 = vadd.xlane.f32.xlu0 %v325
        %v327 = vpop.xlane.xlu0 %326
        %v328 = vsel %vm234, %v233, 0.0
        %329 = vadd.xlane.f32.xlu0 %v328
        %v330 = vpop.xlane.xlu0 %329
        %v331 = vmul.f32 %v200, %v200
        %v332 = vmul.f32 %v201, %v201
        %v333 = vrot.slane %v331, 4
        %v334 = vadd.f32 %v331, %v333
        %v335 = vrot.slane %v334, 2
        %v336 = vadd.f32 %v334, %v335
        %v337 = vrot.slane %v336, 1
        %v338 = vadd.f32 %v336, %v337
        %v339 = vrot.slane %v332, 4
        %v340 = vadd.f32 %v332, %v339
        %v341 = vrot.slane %v340, 2
        %v342 = vadd.f32 %v340, %v341
        %v343 = vrot.slane %v342, 1
        %v344 = vadd.f32 %v342, %v343
        %v346 = vsel %vm234, %v168, 0
        %v349 = vsel %vm234, %v169, 0
        %v352 = vsel %vm234, %v170, 0
        %v355 = vsel %vm234, %v171, 0
        %v358 = vsel %vm234, %v172, 0
        %v361 = vsel %vm234, %v173, 0
        %v364 = vsel %vm234, %v174, 0
        %v367 = vsel %vm234, %v175, 0
        %v370 = vsel %vm234, %v176, 0
        %v373 = vsel %vm234, %v177, 0
        %v376 = vsel %vm234, %v178, 0
        %v379 = vsel %vm234, %v179, 0
        %v382 = vsel %vm234, %v180, 0
        %v385 = vsel %vm234, %v181, 0
        %v388 = vsel %vm234, %v182, 0
        %v391 = vsel %vm234, %v183, 0
        %v394 = vsel %vm234, %v184, 0
        %v397 = vsel %vm234, %v185, 0
        %v400 = vsel %vm234, %v186, 0
        %v403 = vsel %vm234, %v187, 0
        %v406 = vsel %vm234, %v188, 0
        %v409 = vsel %vm234, %v189, 0
        %v412 = vsel %vm234, %v190, 0
        %v415 = vsel %vm234, %v191, 0
        %v418 = vsel %vm234, %v192, 0
        %v421 = vsel %vm234, %v193, 0
        %v424 = vsel %vm234, %v194, 0
        %v427 = vsel %vm234, %v195, 0
        %v430 = vsel %vm234, %v196, 0
        %v433 = vsel %vm234, %v197, 0
        %v436 = vsel %vm234, %v198, 0
        %v439 = vsel %vm234, %v199, 0
        %441 = vmatpush.msra.mxu0 0.0
        %442 = vmatpush.msra.mxu0 0.0
        %443 = vmatpush.msra.mxu0 0.0
        %444 = vmatpush.msra.mxu0 0.0
        %445 = vmatpush.msra.mxu0 0.0
        %446 = vmatpush.msra.mxu0 0.0
        %447 = vmatpush.msra.mxu0 0.0
        %448 = vmatpush.msra.mxu0 0.0
        %449 = vmatpush.msra.mxu0 0.0
        %450 = vmatpush.msra.mxu0 0.0
        %451 = vmatpush.msra.mxu0 0.0
        %452 = vmatpush.msra.mxu0 0.0
        %453 = vmatpush.msra.mxu0 0.0
        %454 = vmatpush.msra.mxu0 0.0
        %455 = vmatpush.msra.mxu0 0.0
        %456 = vmatpush.msra.mxu0 %v200
        %457 = vmatmul.f32.gmra.mxu0 %v346
        %v458 = vpop.f32.mrf.mxu0
        %v459 = vadd.f32 0.0, %v458
        %460 = vmatmul.f32.gmra.mxu0 %v349
        %v461 = vpop.f32.mrf.mxu0
        %v462 = vadd.f32 0.0, %v461
        %463 = vmatmul.f32.gmra.mxu0 %v352
        %v464 = vpop.f32.mrf.mxu0
        %v465 = vadd.f32 0.0, %v464
        %466 = vmatmul.f32.gmra.mxu0 %v355
        %v467 = vpop.f32.mrf.mxu0
        %v468 = vadd.f32 0.0, %v467
        %469 = vmatmul.f32.gmra.mxu0 %v358
        %v470 = vpop.f32.mrf.mxu0
        %v471 = vadd.f32 0.0, %v470
        %472 = vmatmul.f32.gmra.mxu0 %v361
        %v473 = vpop.f32.mrf.mxu0
        %v474 = vadd.f32 0.0, %v473
        %475 = vmatmul.f32.gmra.mxu0 %v364
        %v476 = vpop.f32.mrf.mxu0
        %v477 = vadd.f32 0.0, %v476
        %478 = vmatmul.f32.gmra.mxu0 %v367
        %v479 = vpop.f32.mrf.mxu0
        %v480 = vadd.f32 0.0, %v479
        %481 = vmatmul.f32.gmra.mxu0 %v370
        %v482 = vpop.f32.mrf.mxu0
        %v483 = vadd.f32 0.0, %v482
        %484 = vmatmul.f32.gmra.mxu0 %v373
        %v485 = vpop.f32.mrf.mxu0
        %v486 = vadd.f32 0.0, %v485
        %487 = vmatmul.f32.gmra.mxu0 %v376
        %v488 = vpop.f32.mrf.mxu0
        %v489 = vadd.f32 0.0, %v488
        %490 = vmatmul.f32.gmra.mxu0 %v379
        %v491 = vpop.f32.mrf.mxu0
        %v492 = vadd.f32 0.0, %v491
        %493 = vmatmul.f32.gmra.mxu0 %v382
        %v494 = vpop.f32.mrf.mxu0
        %v495 = vadd.f32 0.0, %v494
        %496 = vmatmul.f32.gmra.mxu0 %v385
        %v497 = vpop.f32.mrf.mxu0
        %v498 = vadd.f32 0.0, %v497
        %499 = vmatmul.f32.gmra.mxu0 %v388
        %v500 = vpop.f32.mrf.mxu0
        %v501 = vadd.f32 0.0, %v500
        %502 = vmatmul.f32.gmra.mxu0 %v391
        %v503 = vpop.f32.mrf.mxu0
        %v504 = vadd.f32 0.0, %v503
        %505 = vmatmul.f32.gmra.mxu0 %v394
        %v506 = vpop.f32.mrf.mxu0
        %v507 = vadd.f32 0.0, %v506
        %508 = vmatmul.f32.gmra.mxu0 %v397
        %v509 = vpop.f32.mrf.mxu0
        %v510 = vadd.f32 0.0, %v509
        %511 = vmatmul.f32.gmra.mxu0 %v400
        %v512 = vpop.f32.mrf.mxu0
        %v513 = vadd.f32 0.0, %v512
        %514 = vmatmul.f32.gmra.mxu0 %v403
        %v515 = vpop.f32.mrf.mxu0
        %v516 = vadd.f32 0.0, %v515
        %517 = vmatmul.f32.gmra.mxu0 %v406
        %v518 = vpop.f32.mrf.mxu0
        %v519 = vadd.f32 0.0, %v518
        %520 = vmatmul.f32.gmra.mxu0 %v409
        %v521 = vpop.f32.mrf.mxu0
        %v522 = vadd.f32 0.0, %v521
        %523 = vmatmul.f32.gmra.mxu0 %v412
        %v524 = vpop.f32.mrf.mxu0
        %v525 = vadd.f32 0.0, %v524
        %526 = vmatmul.f32.gmra.mxu0 %v415
        %v527 = vpop.f32.mrf.mxu0
        %v528 = vadd.f32 0.0, %v527
        %529 = vmatmul.f32.gmra.mxu0 %v418
        %v530 = vpop.f32.mrf.mxu0
        %v531 = vadd.f32 0.0, %v530
        %532 = vmatmul.f32.gmra.mxu0 %v421
        %v533 = vpop.f32.mrf.mxu0
        %v534 = vadd.f32 0.0, %v533
        %535 = vmatmul.f32.gmra.mxu0 %v424
        %v536 = vpop.f32.mrf.mxu0
        %v537 = vadd.f32 0.0, %v536
        %538 = vmatmul.f32.gmra.mxu0 %v427
        %v539 = vpop.f32.mrf.mxu0
        %v540 = vadd.f32 0.0, %v539
        %541 = vmatmul.f32.gmra.mxu0 %v430
        %v542 = vpop.f32.mrf.mxu0
        %v543 = vadd.f32 0.0, %v542
        %544 = vmatmul.f32.gmra.mxu0 %v433
        %v545 = vpop.f32.mrf.mxu0
        %v546 = vadd.f32 0.0, %v545
        %547 = vmatmul.f32.gmra.mxu0 %v436
        %v548 = vpop.f32.mrf.mxu0
        %v549 = vadd.f32 0.0, %v548
        %550 = vmatmul.f32.gmra.mxu0 %v439
        %v551 = vpop.f32.mrf.mxu0
        %v552 = vadd.f32 0.0, %v551
        %553 = vdwg.mxu0
        %554 = vmatpush.msra.mxu0 0.0
        %555 = vmatpush.msra.mxu0 0.0
        %556 = vmatpush.msra.mxu0 0.0
        %557 = vmatpush.msra.mxu0 0.0
        %558 = vmatpush.msra.mxu0 0.0
        %559 = vmatpush.msra.mxu0 0.0
        %560 = vmatpush.msra.mxu0 0.0
        %561 = vmatpush.msra.mxu0 0.0
        %562 = vmatpush.msra.mxu0 0.0
        %563 = vmatpush.msra.mxu0 0.0
        %564 = vmatpush.msra.mxu0 0.0
        %565 = vmatpush.msra.mxu0 0.0
        %566 = vmatpush.msra.mxu0 0.0
        %567 = vmatpush.msra.mxu0 0.0
        %568 = vmatpush.msra.mxu0 0.0
        %569 = vmatpush.msra.mxu0 %v201
        %570 = vmatmul.f32.gmra.mxu0 %v346
        %v571 = vpop.f32.mrf.mxu0
        %v572 = vadd.f32 0.0, %v571
        %573 = vmatmul.f32.gmra.mxu0 %v349
        %v574 = vpop.f32.mrf.mxu0
        %v575 = vadd.f32 0.0, %v574
        %576 = vmatmul.f32.gmra.mxu0 %v352
        %v577 = vpop.f32.mrf.mxu0
        %v578 = vadd.f32 0.0, %v577
        %579 = vmatmul.f32.gmra.mxu0 %v355
        %v580 = vpop.f32.mrf.mxu0
        %v581 = vadd.f32 0.0, %v580
        %582 = vmatmul.f32.gmra.mxu0 %v358
        %v583 = vpop.f32.mrf.mxu0
        %v584 = vadd.f32 0.0, %v583
        %585 = vmatmul.f32.gmra.mxu0 %v361
        %v586 = vpop.f32.mrf.mxu0
        %v587 = vadd.f32 0.0, %v586
        %588 = vmatmul.f32.gmra.mxu0 %v364
        %v589 = vpop.f32.mrf.mxu0
        %v590 = vadd.f32 0.0, %v589
        %591 = vmatmul.f32.gmra.mxu0 %v367
        %v592 = vpop.f32.mrf.mxu0
        %v593 = vadd.f32 0.0, %v592
        %594 = vmatmul.f32.gmra.mxu0 %v370
        %v595 = vpop.f32.mrf.mxu0
        %v596 = vadd.f32 0.0, %v595
        %597 = vmatmul.f32.gmra.mxu0 %v373
        %v598 = vpop.f32.mrf.mxu0
        %v599 = vadd.f32 0.0, %v598
        %600 = vmatmul.f32.gmra.mxu0 %v376
        %v601 = vpop.f32.mrf.mxu0
        %v602 = vadd.f32 0.0, %v601
        %603 = vmatmul.f32.gmra.mxu0 %v379
        %v604 = vpop.f32.mrf.mxu0
        %v605 = vadd.f32 0.0, %v604
        %606 = vmatmul.f32.gmra.mxu0 %v382
        %v607 = vpop.f32.mrf.mxu0
        %v608 = vadd.f32 0.0, %v607
        %609 = vmatmul.f32.gmra.mxu0 %v385
        %v610 = vpop.f32.mrf.mxu0
        %v611 = vadd.f32 0.0, %v610
        %612 = vmatmul.f32.gmra.mxu0 %v388
        %v613 = vpop.f32.mrf.mxu0
        %v614 = vadd.f32 0.0, %v613
        %615 = vmatmul.f32.gmra.mxu0 %v391
        %v616 = vpop.f32.mrf.mxu0
        %v617 = vadd.f32 0.0, %v616
        %618 = vmatmul.f32.gmra.mxu0 %v394
        %v619 = vpop.f32.mrf.mxu0
        %v620 = vadd.f32 0.0, %v619
        %621 = vmatmul.f32.gmra.mxu0 %v397
        %v622 = vpop.f32.mrf.mxu0
        %v623 = vadd.f32 0.0, %v622
        %624 = vmatmul.f32.gmra.mxu0 %v400
        %v625 = vpop.f32.mrf.mxu0
        %v626 = vadd.f32 0.0, %v625
        %627 = vmatmul.f32.gmra.mxu0 %v403
        %v628 = vpop.f32.mrf.mxu0
        %v629 = vadd.f32 0.0, %v628
        %630 = vmatmul.f32.gmra.mxu0 %v406
        %v631 = vpop.f32.mrf.mxu0
        %v632 = vadd.f32 0.0, %v631
        %633 = vmatmul.f32.gmra.mxu0 %v409
        %v634 = vpop.f32.mrf.mxu0
        %v635 = vadd.f32 0.0, %v634
        %636 = vmatmul.f32.gmra.mxu0 %v412
        %v637 = vpop.f32.mrf.mxu0
        %v638 = vadd.f32 0.0, %v637
        %639 = vmatmul.f32.gmra.mxu0 %v415
        %v640 = vpop.f32.mrf.mxu0
        %v641 = vadd.f32 0.0, %v640
        %642 = vmatmul.f32.gmra.mxu0 %v418
        %v643 = vpop.f32.mrf.mxu0
        %v644 = vadd.f32 0.0, %v643
        %645 = vmatmul.f32.gmra.mxu0 %v421
        %v646 = vpop.f32.mrf.mxu0
        %v647 = vadd.f32 0.0, %v646
        %648 = vmatmul.f32.gmra.mxu0 %v424
        %v649 = vpop.f32.mrf.mxu0
        %v650 = vadd.f32 0.0, %v649
        %651 = vmatmul.f32.gmra.mxu0 %v427
        %v652 = vpop.f32.mrf.mxu0
        %v653 = vadd.f32 0.0, %v652
        %654 = vmatmul.f32.gmra.mxu0 %v430
        %v655 = vpop.f32.mrf.mxu0
        %v656 = vadd.f32 0.0, %v655
        %657 = vmatmul.f32.gmra.mxu0 %v433
        %v658 = vpop.f32.mrf.mxu0
        %v659 = vadd.f32 0.0, %v658
        %660 = vmatmul.f32.gmra.mxu0 %v436
        %v661 = vpop.f32.mrf.mxu0
        %v662 = vadd.f32 0.0, %v661
        %663 = vmatmul.f32.gmra.mxu0 %v439
        %v664 = vpop.f32.mrf.mxu0
        %v665 = vadd.f32 0.0, %v664
        %666 = vdwg.mxu0
        %v667 = vadd.f32 %v237, %v338
        %v668 = vadd.f32 %v237, %v344
        %v669 = vadd.f32 %v240, %v338
        %v670 = vadd.f32 %v240, %v344
        %v671 = vadd.f32 %v243, %v338
        %v672 = vadd.f32 %v243, %v344
        %v673 = vadd.f32 %v246, %v338
        %v674 = vadd.f32 %v246, %v344
        %v675 = vadd.f32 %v249, %v338
        %v676 = vadd.f32 %v249, %v344
        %v677 = vadd.f32 %v252, %v338
        %v678 = vadd.f32 %v252, %v344
        %v679 = vadd.f32 %v255, %v338
        %v680 = vadd.f32 %v255, %v344
        %v681 = vadd.f32 %v258, %v338
        %v682 = vadd.f32 %v258, %v344
        %v683 = vadd.f32 %v261, %v338
        %v684 = vadd.f32 %v261, %v344
        %v685 = vadd.f32 %v264, %v338
        %v686 = vadd.f32 %v264, %v344
        %v687 = vadd.f32 %v267, %v338
        %v688 = vadd.f32 %v267, %v344
        %v689 = vadd.f32 %v270, %v338
        %v690 = vadd.f32 %v270, %v344
        %v691 = vadd.f32 %v273, %v338
        %v692 = vadd.f32 %v273, %v344
        %v693 = vadd.f32 %v276, %v338
        %v694 = vadd.f32 %v276, %v344
        %v695 = vadd.f32 %v279, %v338
        %v696 = vadd.f32 %v279, %v344
        %v697 = vadd.f32 %v282, %v338
        %v698 = vadd.f32 %v282, %v344
        %v699 = vadd.f32 %v285, %v338
        %v700 = vadd.f32 %v285, %v344
        %v701 = vadd.f32 %v288, %v338
        %v702 = vadd.f32 %v288, %v344
        %v703 = vadd.f32 %v291, %v338
        %v704 = vadd.f32 %v291, %v344
        %v705 = vadd.f32 %v294, %v338
        %v706 = vadd.f32 %v294, %v344
        %v707 = vadd.f32 %v297, %v338
        %v708 = vadd.f32 %v297, %v344
        %v709 = vadd.f32 %v300, %v338
        %v710 = vadd.f32 %v300, %v344
        %v711 = vadd.f32 %v303, %v338
        %v712 = vadd.f32 %v303, %v344
        %v713 = vadd.f32 %v306, %v338
        %v714 = vadd.f32 %v306, %v344
        %v715 = vadd.f32 %v309, %v338
        %v716 = vadd.f32 %v309, %v344
        %v717 = vadd.f32 %v312, %v338
        %v718 = vadd.f32 %v312, %v344
        %v719 = vadd.f32 %v315, %v338
        %v720 = vadd.f32 %v315, %v344
        %v721 = vadd.f32 %v318, %v338
        %v722 = vadd.f32 %v318, %v344
        %v723 = vadd.f32 %v321, %v338
        %v724 = vadd.f32 %v321, %v344
        %v725 = vadd.f32 %v324, %v338
        %v726 = vadd.f32 %v324, %v344
        %v727 = vadd.f32 %v327, %v338
        %v728 = vadd.f32 %v327, %v344
        %v729 = vadd.f32 %v330, %v338
        %v730 = vadd.f32 %v330, %v344
        %v731 = vmul.f32 %v459, 2.0
        %v732 = vmul.f32 %v572, 2.0
        %v733 = vmul.f32 %v462, 2.0
        %v734 = vmul.f32 %v575, 2.0
        %v735 = vmul.f32 %v465, 2.0
        %v736 = vmul.f32 %v578, 2.0
        %v737 = vmul.f32 %v468, 2.0
        %v738 = vmul.f32 %v581, 2.0
        %v739 = vmul.f32 %v471, 2.0
        %v740 = vmul.f32 %v584, 2.0
        %v741 = vmul.f32 %v474, 2.0
        %v742 = vmul.f32 %v587, 2.0
        %v743 = vmul.f32 %v477, 2.0
        %v744 = vmul.f32 %v590, 2.0
        %v745 = vmul.f32 %v480, 2.0
        %v746 = vmul.f32 %v593, 2.0
        %v747 = vmul.f32 %v483, 2.0
        %v748 = vmul.f32 %v596, 2.0
        %v749 = vmul.f32 %v486, 2.0
        %v750 = vmul.f32 %v599, 2.0
        %v751 = vmul.f32 %v489, 2.0
        %v752 = vmul.f32 %v602, 2.0
        %v753 = vmul.f32 %v492, 2.0
        %v754 = vmul.f32 %v605, 2.0
        %v755 = vmul.f32 %v495, 2.0
        %v756 = vmul.f32 %v608, 2.0
        %v757 = vmul.f32 %v498, 2.0
        %v758 = vmul.f32 %v611, 2.0
        %v759 = vmul.f32 %v501, 2.0
        %v760 = vmul.f32 %v614, 2.0
        %v761 = vmul.f32 %v504, 2.0
        %v762 = vmul.f32 %v617, 2.0
        %v763 = vmul.f32 %v507, 2.0
        %v764 = vmul.f32 %v620, 2.0
        %v765 = vmul.f32 %v510, 2.0
        %v766 = vmul.f32 %v623, 2.0
        %v767 = vmul.f32 %v513, 2.0
        %v768 = vmul.f32 %v626, 2.0
        %v769 = vmul.f32 %v516, 2.0
        %v770 = vmul.f32 %v629, 2.0
        %v771 = vmul.f32 %v519, 2.0
        %v772 = vmul.f32 %v632, 2.0
        %v773 = vmul.f32 %v522, 2.0
        %v774 = vmul.f32 %v635, 2.0
        %v775 = vmul.f32 %v525, 2.0
        %v776 = vmul.f32 %v638, 2.0
        %v777 = vmul.f32 %v528, 2.0
        %v778 = vmul.f32 %v641, 2.0
        %v779 = vmul.f32 %v531, 2.0
        %v780 = vmul.f32 %v644, 2.0
        %v781 = vmul.f32 %v534, 2.0
        %v782 = vmul.f32 %v647, 2.0
        %v783 = vmul.f32 %v537, 2.0
        %v784 = vmul.f32 %v650, 2.0
        %v785 = vmul.f32 %v540, 2.0
        %v786 = vmul.f32 %v653, 2.0
        %v787 = vmul.f32 %v543, 2.0
        %v788 = vmul.f32 %v656, 2.0
        %v789 = vmul.f32 %v546, 2.0
        %v790 = vmul.f32 %v659, 2.0
        %v791 = vmul.f32 %v549, 2.0
        %v792 = vmul.f32 %v662, 2.0
        %v793 = vmul.f32 %v552, 2.0
        %v794 = vmul.f32 %v665, 2.0
        %v795 = vsub.f32 %v667, %v731
        %v796 = vsub.f32 %v668, %v732
        %v797 = vsub.f32 %v669, %v733
        %v798 = vsub.f32 %v670, %v734
        %v799 = vsub.f32 %v671, %v735
        %v800 = vsub.f32 %v672, %v736
        %v801 = vsub.f32 %v673, %v737
        %v802 = vsub.f32 %v674, %v738
        %v803 = vsub.f32 %v675, %v739
        %v804 = vsub.f32 %v676, %v740
        %v805 = vsub.f32 %v677, %v741
        %v806 = vsub.f32 %v678, %v742
        %v807 = vsub.f32 %v679, %v743
        %v808 = vsub.f32 %v680, %v744
        %v809 = vsub.f32 %v681, %v745
        %v810 = vsub.f32 %v682, %v746
        %v811 = vsub.f32 %v683, %v747
        %v812 = vsub.f32 %v684, %v748
        %v813 = vsub.f32 %v685, %v749
        %v814 = vsub.f32 %v686, %v750
        %v815 = vsub.f32 %v687, %v751
        %v816 = vsub.f32 %v688, %v752
        %v817 = vsub.f32 %v689, %v753
        %v818 = vsub.f32 %v690, %v754
        %v819 = vsub.f32 %v691, %v755
        %v820 = vsub.f32 %v692, %v756
        %v821 = vsub.f32 %v693, %v757
        %v822 = vsub.f32 %v694, %v758
        %v823 = vsub.f32 %v695, %v759
        %v824 = vsub.f32 %v696, %v760
        %v825 = vsub.f32 %v697, %v761
        %v826 = vsub.f32 %v698, %v762
        %v827 = vsub.f32 %v699, %v763
        %v828 = vsub.f32 %v700, %v764
        %v829 = vsub.f32 %v701, %v765
        %v830 = vsub.f32 %v702, %v766
        %v831 = vsub.f32 %v703, %v767
        %v832 = vsub.f32 %v704, %v768
        %v833 = vsub.f32 %v705, %v769
        %v834 = vsub.f32 %v706, %v770
        %v835 = vsub.f32 %v707, %v771
        %v836 = vsub.f32 %v708, %v772
        %v837 = vsub.f32 %v709, %v773
        %v838 = vsub.f32 %v710, %v774
        %v839 = vsub.f32 %v711, %v775
        %v840 = vsub.f32 %v712, %v776
        %v841 = vsub.f32 %v713, %v777
        %v842 = vsub.f32 %v714, %v778
        %v843 = vsub.f32 %v715, %v779
        %v844 = vsub.f32 %v716, %v780
        %v845 = vsub.f32 %v717, %v781
        %v846 = vsub.f32 %v718, %v782
        %v847 = vsub.f32 %v719, %v783
        %v848 = vsub.f32 %v720, %v784
        %v849 = vsub.f32 %v721, %v785
        %v850 = vsub.f32 %v722, %v786
        %v851 = vsub.f32 %v723, %v787
        %v852 = vsub.f32 %v724, %v788
        %v853 = vsub.f32 %v725, %v789
        %v854 = vsub.f32 %v726, %v790
        %v855 = vsub.f32 %v727, %v791
        %v856 = vsub.f32 %v728, %v792
        %v857 = vsub.f32 %v729, %v793
        %v858 = vsub.f32 %v730, %v794
        %859 = vst [vmem:[%s154] sm:$0xff] %v795
        %860 = vst [vmem:[%s154 + $0x8] sm:$0xff] %v796
        %861 = vst [vmem:[%s154 + $0x10] sm:$0xff] %v797
        %862 = vst [vmem:[%s154 + $0x18] sm:$0xff] %v798
        %863 = vst [vmem:[%s154 + $0x20] sm:$0xff] %v799
        %864 = vst [vmem:[%s154 + $0x28] sm:$0xff] %v800
        %865 = vst [vmem:[%s154 + $0x30] sm:$0xff] %v801
        %866 = vst [vmem:[%s154 + $0x38] sm:$0xff] %v802
        %867 = vst [vmem:[%s154 + $0x40] sm:$0xff] %v803
        %868 = vst [vmem:[%s154 + $0x48] sm:$0xff] %v804
        %869 = vst [vmem:[%s154 + $0x50] sm:$0xff] %v805
        %870 = vst [vmem:[%s154 + $0x58] sm:$0xff] %v806
        %871 = vst [vmem:[%s154 + $0x60] sm:$0xff] %v807
        %872 = vst [vmem:[%s154 + $0x68] sm:$0xff] %v808
        %873 = vst [vmem:[%s154 + $0x70] sm:$0xff] %v809
        %874 = vst [vmem:[%s154 + $0x78] sm:$0xff] %v810
        %875 = vst [vmem:[%s154 + $0x80] sm:$0xff] %v811
        %876 = vst [vmem:[%s154 + $0x88] sm:$0xff] %v812
        %877 = vst [vmem:[%s154 + $0x90] sm:$0xff] %v813
        %878 = vst [vmem:[%s154 + $0x98] sm:$0xff] %v814
        %879 = vst [vmem:[%s154 + $0xa0] sm:$0xff] %v815
        %880 = vst [vmem:[%s154 + $0xa8] sm:$0xff] %v816
        %881 = vst [vmem:[%s154 + $0xb0] sm:$0xff] %v817
        %882 = vst [vmem:[%s154 + $0xb8] sm:$0xff] %v818
        %883 = vst [vmem:[%s154 + $0xc0] sm:$0xff] %v819
        %884 = vst [vmem:[%s154 + $0xc8] sm:$0xff] %v820
        %885 = vst [vmem:[%s154 + $0xd0] sm:$0xff] %v821
        %886 = vst [vmem:[%s154 + $0xd8] sm:$0xff] %v822
        %887 = vst [vmem:[%s154 + $0xe0] sm:$0xff] %v823
        %888 = vst [vmem:[%s154 + $0xe8] sm:$0xff] %v824
        %889 = vst [vmem:[%s154 + $0xf0] sm:$0xff] %v825
        %890 = vst [vmem:[%s154 + $0xf8] sm:$0xff] %v826
        %891 = vst [vmem:[%s154 + $0x100] sm:$0xff] %v827
        %892 = vst [vmem:[%s154 + $0x108] sm:$0xff] %v828
        %893 = vst [vmem:[%s154 + $0x110] sm:$0xff] %v829
        %894 = vst [vmem:[%s154 + $0x118] sm:$0xff] %v830
        %895 = vst [vmem:[%s154 + $0x120] sm:$0xff] %v831
        %896 = vst [vmem:[%s154 + $0x128] sm:$0xff] %v832
        %897 = vst [vmem:[%s154 + $0x130] sm:$0xff] %v833
        %898 = vst [vmem:[%s154 + $0x138] sm:$0xff] %v834
        %899 = vst [vmem:[%s154 + $0x140] sm:$0xff] %v835
        %900 = vst [vmem:[%s154 + $0x148] sm:$0xff] %v836
        %901 = vst [vmem:[%s154 + $0x150] sm:$0xff] %v837
        %902 = vst [vmem:[%s154 + $0x158] sm:$0xff] %v838
        %903 = vst [vmem:[%s154 + $0x160] sm:$0xff] %v839
        %904 = vst [vmem:[%s154 + $0x168] sm:$0xff] %v840
        %905 = vst [vmem:[%s154 + $0x170] sm:$0xff] %v841
        %906 = vst [vmem:[%s154 + $0x178] sm:$0xff] %v842
        %907 = vst [vmem:[%s154 + $0x180] sm:$0xff] %v843
        %908 = vst [vmem:[%s154 + $0x188] sm:$0xff] %v844
        %909 = vst [vmem:[%s154 + $0x190] sm:$0xff] %v845
        %910 = vst [vmem:[%s154 + $0x198] sm:$0xff] %v846
        %911 = vst [vmem:[%s154 + $0x1a0] sm:$0xff] %v847
        %912 = vst [vmem:[%s154 + $0x1a8] sm:$0xff] %v848
        %913 = vst [vmem:[%s154 + $0x1b0] sm:$0xff] %v849
        %914 = vst [vmem:[%s154 + $0x1b8] sm:$0xff] %v850
        %915 = vst [vmem:[%s154 + $0x1c0] sm:$0xff] %v851
        %916 = vst [vmem:[%s154 + $0x1c8] sm:$0xff] %v852
        %917 = vst [vmem:[%s154 + $0x1d0] sm:$0xff] %v853
        %918 = vst [vmem:[%s154 + $0x1d8] sm:$0xff] %v854
        %919 = vst [vmem:[%s154 + $0x1e0] sm:$0xff] %v855
        %920 = vst [vmem:[%s154 + $0x1e8] sm:$0xff] %v856
        %921 = vst [vmem:[%s154 + $0x1f0] sm:$0xff] %v857
        %922 = vst [vmem:[%s154 + $0x1f8] sm:$0xff] %v858
        %s923 = sand.u32 %s76, 1
        %s924 = scalar_lea.sflag [#allocation3], %s923
        %s925 = sand.u32 %s76, 1
        %s926 = smul.addr %s925, 512
        %s927 = scalar_lea.vmem [#allocation2], %s926
        // Predicated region
        $region29: #{tpu_custom_call.1} parent=27 // pred_check
          %p928 = pneg %p86
        $region30: #{tpu_custom_call.1} parent=27 // pred_check_branch
          %930 = sbr.rel (%p928) target = $region32
        $region31: #{tpu_custom_call.1} parent=27 // pred_region
          %s931 = smul.u32 2, %s16
          %933 = vsyncadd %s924, 0
          %s934 = smul.addr %s931, 32
          %s935 = smul.addr %s934, 8
          %s936 = scalar_lea.hbm %s2, %s935
          %s937 = sshll.u32 %s927, 4
          %s938 = int_to_ptr.vmem [resolvable:$true] %s937
          %s939 = sshll.u32 %s936, 4
          %s940 = int_to_ptr.hbm [resolvable:$true] %s939
          %945 = dma.vmem_to_hbm [thread:$0]  %s938, 8192, %s940, %s924, 256, 256, 16
        $region32: #{tpu_custom_call.1} parent=27 // pred_fallthru
          _
      $region28: #{tpu_custom_call.1} parent=5 // pred_fallthru
        _
      %p946 = scmp.le.s32.totalorder 2, %s11
      // Predicated region
      $region33: #{tpu_custom_call.1} parent=5 // pred_check
        %p947 = pneg %p946
      $region34: #{tpu_custom_call.1} parent=5 // pred_check_branch
        %949 = sbr.rel (%p947) target = $region36
      $region35: #{tpu_custom_call.1} parent=5 // pred_region
        %s950 = ssub.s32 %s11, 2
        // Predicated region
        $region37: #{tpu_custom_call.1} parent=35 // pred_check
          %p951 = pneg %p92
        $region38: #{tpu_custom_call.1} parent=35 // pred_check_branch
          %953 = sbr.rel (%p951) target = $region40
        $region39: #{tpu_custom_call.1} parent=35 // pred_region
          %s954 = sand.u32 %s77, 1
          %s955 = scalar_lea.sflag [#allocation3], %s954
          %s956 = sand.u32 %s77, 1
          %s957 = smul.addr %s956, 512
          %s958 = scalar_lea.vmem [#allocation2], %s957
          %960 = dma.done %s955, 8192
        $region40: #{tpu_custom_call.1} parent=35 // pred_fallthru
          _
      $region36: #{tpu_custom_call.1} parent=5 // pred_fallthru
        _
    $region6: #{tpu_custom_call.1} parent=1 // loop_footer
      %s15 = sadd.s32 1, %s11
    $region7: #{tpu_custom_call.1} parent=1 // loop_footer_branch
      %10 = sbr.rel target = $region3
    $region8: #{tpu_custom_call.1} parent=1 // loop_exit
      _
    %961 = vsyncpa [#allocation3], 1
    %s962 = scalar_lea.sflag [#allocation3], 1
    %963 = vsyncpa %s962, 1

</llo_original>
